<compile_context>
chip_gen: v7x
topology: tpu7x:2x2x1
jax: 0.10.0
libtpu: 0.0.40
codegen_flags: <defaults>
</compile_context>

<pallas_src>
import math
from functools import partial

import numpy as np
import jax
import jax.numpy as jnp
from jax.experimental import pallas as pl
from jax.experimental.pallas import tpu as pltpu


def _round_up(v, m):
    return ((v + m - 1) // m) * m


# --------------------------- fused Pallas kernel -----------------------------

def _fused_conv_bn_relu_kernel(w_ref, p_ref, b_ref, mx_ref, ms_ref, g_ref,
                               be_ref, o_ref, *, inv_count, eps):
    # w_ref : (Cp, Kp)  Rout-averaged conv weights (channels on sublanes)
    # p_ref : (Kp, Mp)  im2col patches^T (taps on sublanes, pixels on lanes)
    # b_ref : (Cp, 1)   conv bias
    # mx_ref: (1, Mp)   data mask: 0 at CleanVertices(r-1) pixels and pad cols
    # ms_ref: (1, Mp)   stats mask: 0 only at pad columns
    # g_ref : (Cp, 1)   BN gamma;  be_ref: (Cp, 1) BN beta
    # o_ref : (Cp, Mp)
    conv = jnp.dot(w_ref[...], p_ref[...], preferred_element_type=jnp.float32)
    x = (conv + b_ref[...]) * mx_ref[...]          # bias + CleanVertices(r-1)

    # BatchNorm2d, training mode: per-channel batch mean / biased variance over
    # the M valid pixel columns (lane-axis reductions -> XLU slot).
    mean = jnp.sum(x, axis=1, keepdims=True) * inv_count
    d = (x - mean) * ms_ref[...]                   # exclude pad columns
    var = jnp.sum(d * d, axis=1, keepdims=True) * inv_count
    inv = jax.lax.rsqrt(var + eps)
    y = d * inv * g_ref[...] + be_ref[...]
    o_ref[...] = jnp.maximum(y, 0.0)               # ReLU


def fused_conv_bn_relu(w_mat, patches_t, bias, mask_x, mask_stat, gamma, beta,
                       *, n_valid):
    Cp, Kp = w_mat.shape
    Mp = patches_t.shape[1]
    kernel = partial(_fused_conv_bn_relu_kernel,
                     inv_count=1.0 / float(n_valid), eps=1e-5)
    # TODO(synk): on v7x (2 TensorCores) a 2-way parallel split of Mp with a
    # cross-core reduction for the BN stats would use both cores; at these
    # sizes a single grid step is faster than the extra sync.
    return pl.pallas_call(
        kernel,
        out_shape=jax.ShapeDtypeStruct((Cp, Mp), jnp.float32),
        grid=(1,),
        in_specs=[
            pl.BlockSpec((Cp, Kp), lambda i: (0, 0)),
            pl.BlockSpec((Kp, Mp), lambda i: (0, 0)),
            pl.BlockSpec((Cp, 1), lambda i: (0, 0)),
            pl.BlockSpec((1, Mp), lambda i: (0, 0)),
            pl.BlockSpec((1, Mp), lambda i: (0, 0)),
            pl.BlockSpec((Cp, 1), lambda i: (0, 0)),
            pl.BlockSpec((Cp, 1), lambda i: (0, 0)),
        ],
        out_specs=pl.BlockSpec((Cp, Mp), lambda i: (0, 0)),
        compiler_params=pltpu.CompilerParams(
            dimension_semantics=("arbitrary",)),
    )(w_mat, patches_t, bias, mask_x, mask_stat, gamma, beta)


# --------------------------- icosahedral glue -------------------------------

def clean_vertices(x):
    # CleanVertices: zero the two pole pixels of every chart.
    x = x.at[..., -1, 0].set(0.0)
    x = x.at[..., 0, -1].set(0.0)
    return x


def build_pad_reorder_idx(r, R):
    # Direct translation of PadIco.__init__ (torch.roll/flip -> numpy).
    H, W = 2 ** r, 2 ** (r + 1)
    idx_in = np.arange(R * 5 * H * W, dtype=np.int64).reshape(R, 5, H, W)
    idx_out = np.zeros((R, 5, H + 2, W + 2), dtype=np.int64)
    idx_out[..., 1:-1, 1:-1] = idx_in
    rc = lambda a, s: np.roll(a, s, axis=-3)   # roll over charts
    rR = lambda a, s: np.roll(a, s, axis=-4)   # roll over R
    idx_out[..., 0, 1:2 ** r + 1] = rc(idx_in, 1)[..., -1, 2 ** r:]
    idx_out[..., 0, 2 ** r + 1:-1] = np.flip(rR(rc(idx_in, 1), -1)[..., :, -1], -1)
    idx_out[..., -1, 2:2 ** r + 2] = np.flip(rR(rc(idx_in, -1), -1)[..., :, 0], -1)
    idx_out[..., -1, 2 ** r + 1:-1] = rc(idx_in, -1)[..., 0, 0:2 ** r]
    idx_out[..., 1:-1, 0] = np.flip(rR(rc(idx_in, 1), 1)[..., -1, 0:2 ** r], -1)
    idx_out[..., 2:, -1] = np.flip(rR(rc(idx_in, -1), 1)[..., 0, 2 ** r:], -1)
    return idx_out.astype(np.int32)


def pad_ico(x, reorder_idx):
    # x: (..., R, 5, H, W) -> (..., R, 5, H+2, W+2)
    x = clean_vertices(x)                      # PadIco.process_vertices
    lead = x.shape[:-4]
    x_flat = x.reshape(lead + (-1,))
    return jnp.take(x_flat, jnp.asarray(reorder_idx), axis=-1)


def expand_kernel(weight, kernel_type, c_out, c_in, Rin):
    # StrideConv.get_kernel
    if kernel_type == 'discovered':
        Rout, n = 1, 1
        idx_k = np.array([(0, 0, -1, 0, 0, 0, -1, 0, 0)], dtype=np.int64)
    elif kernel_type == 'baseline':
        Rout, n = 6, 7
        idx_k = np.array([(5, 4, -1, 6, 0, 3, -1, 1, 2),
                          (4, 3, -1, 5, 0, 2, -1, 6, 1),
                          (3, 2, -1, 4, 0, 1, -1, 5, 6),
                          (2, 1, -1, 3, 0, 6, -1, 4, 5),
                          (1, 6, -1, 2, 0, 5, -1, 3, 4),
                          (6, 5, -1, 1, 0, 4, -1, 2, 3)], dtype=np.int64)
    else:
        raise ValueError('Invalid kernel type')
    idx_k = np.where(idx_k < 0, idx_k + n, idx_k)   # torch's -1 -> last slot
    ker = weight[:, :, :, idx_k]                    # (Cout, Cin, Rin, Rout, 9)
    ker = jnp.transpose(ker, (0, 3, 1, 2, 4))       # (Cout, Rout, Cin, Rin, 9)
    ker = ker.reshape(c_out, Rout, c_in, Rin, 3, 3)
    ker = ker.at[..., 0, 2].set(0.0)
    ker = ker.at[..., 2, 0].set(0.0)
    return ker, Rout


# --------------------------- forward ----------------------------------------

def gauge_down_layer_forward(x, params, *, kernel_type, r, c_in, c_out,
                             matmul_dtype=jnp.float32):
    # matmul_dtype=jnp.bfloat16 is recommended on v6e/v7x (MXU bf16-native,
    # f32 accumulation kept); default f32 preserves exact reference numerics.
    B = x.shape[0]
    Rin = 1
    H, W = 2 ** r, 2 ** (r + 1)
    H2, W2 = H // 2, W // 2

    # ---- icosahedral halo padding (static-index gather, plain JAX) ----
    xp = pad_ico(x, params['reorder_idx'])            # (B, Cin, 1, 5, H+2, W+2)
    xp = xp.reshape(B, c_in * Rin, 5, H + 2, W + 2)

    # ---- im2col at the FINAL output pixel positions ----
    # For final pixel (i, j) of a chart, StrideConv(stride=2, pad=1) followed by
    # crop[1:-1,1:-1] and replicate-pad(bottom/right) reads the 3x3 window
    # centred at padded-chart coords (2*min(i+1,H2-1), 2*min(j+1,W2-1)); every
    # tap stays inside the chart's halo, so crop/replicate-pad fold into this
    # static slice+concat selection (no cross-chart reads, no lane transposes).
    taps = []
    for kh in range(3):
        rmain = xp[:, :, :, 1 + kh:H - 1 + kh:2, :]           # rows 2i+1+kh
        rlast = xp[:, :, :, H - 3 + kh:H - 2 + kh, :]         # replicated row
        xr = jnp.concatenate([rmain, rlast], axis=3)          # (B,CinR,5,H2,W+2)
        for kw in range(3):
            cmain = xr[..., 1 + kw:W - 1 + kw:2]              # cols 2j+1+kw
            clast = xr[..., W - 3 + kw:W - 2 + kw]            # replicated col
            taps.append(jnp.concatenate([cmain, clast], axis=4))
    patches = jnp.stack(taps, axis=2)                 # (B, CinR, 9, 5, H2, W2)

    K = c_in * Rin * 9
    M = B * 5 * H2 * W2
    patches_t = patches.reshape(B, K, 5 * H2 * W2)
    patches_t = jnp.transpose(patches_t, (1, 0, 2)).reshape(K, M)   # (K, M)

    # ---- weights: expand, hex-mask, average over Rout ----
    # Valid because BatchNorm immediately averages the conv output over Rout
    # and crop/pad/CleanVertices commute with that per-pixel average.
    ker, _rout = expand_kernel(params['weight'], kernel_type, c_out, c_in, Rin)
    w_mat = jnp.mean(ker, axis=1).reshape(c_out, K)   # (Cout, K)

    # ---- pad to (8, 8, 128)-aligned shapes for unmasked vld/vst & MXU tiles --
    Kp = _round_up(K, 8)
    Cp = _round_up(c_out, 8)
    Mp = _round_up(M, 128)
    w_mat = jnp.pad(w_mat, ((0, Cp - c_out), (0, Kp - K)))
    patches_t = jnp.pad(patches_t, ((0, Kp - K), (0, Mp - M)))
    bias = jnp.pad(params['bias'], (0, Cp - c_out)).reshape(Cp, 1)
    gamma = jnp.pad(params['bn_gamma'], (0, Cp - c_out)).reshape(Cp, 1)
    beta = jnp.pad(params['bn_beta'], (0, Cp - c_out)).reshape(Cp, 1)

    # Static masks: CleanVertices(r-1) zeroing + exclusion of pad columns.
    mv = np.ones((B, 5, H2, W2), np.float32)
    mv[:, :, H2 - 1, 0] = 0.0
    mv[:, :, 0, W2 - 1] = 0.0
    mask_x = np.zeros((1, Mp), np.float32)
    mask_x[0, :M] = mv.reshape(-1)
    mask_stat = np.zeros((1, Mp), np.float32)
    mask_stat[0, :M] = 1.0

    if matmul_dtype != jnp.float32:
        w_mat = w_mat.astype(matmul_dtype)
        patches_t = patches_t.astype(matmul_dtype)

    # ---- fused conv + bias + clean + BatchNorm(batch stats) + ReLU ----
    # TODO(synk): BatchNorm running-stat updates (training side effect) are not
    # reproduced; forward output uses batch statistics as in training mode.
    out2d = fused_conv_bn_relu(w_mat, patches_t, bias,
                               jnp.asarray(mask_x), jnp.asarray(mask_stat),
                               gamma, beta, n_valid=M)        # (Cp, Mp)

    out = out2d[:c_out, :M].reshape(c_out, B, 5, H2, W2)
    out = jnp.transpose(out, (1, 0, 2, 3, 4))[:, :, None]     # (B,Cout,1,5,H2,W2)
    return out


def init_params(key, kernel_type, r, c_in, c_out):
    Rin = 1
    n = 1 if kernel_type == 'discovered' else 7
    s = math.sqrt(2 / (3 * 3 * c_in * Rin))
    weight = s * jax.random.normal(key, (c_out, c_in, Rin, n), dtype=jnp.float32)
    return dict(
        weight=weight,
        bias=jnp.zeros((c_out,), jnp.float32),
        bn_gamma=jnp.ones((c_out,), jnp.float32),
        bn_beta=jnp.zeros((c_out,), jnp.float32),
        reorder_idx=build_pad_reorder_idx(r, Rin),
    )


if __name__ == "__main__":
    kernel_type = 'baseline'   # Rout=6 ('discovered', Rout=1, also supported)
    r, B, c_in, c_out = 4, 2, 4, 8
    H, W = 2 ** r, 2 ** (r + 1)

    key = jax.random.PRNGKey(0)
    kp, kx = jax.random.split(key)
    params = init_params(kp, kernel_type, r, c_in, c_out)
    x = jax.random.normal(kx, (B, c_in, 1, 5, H, W), dtype=jnp.float32)

    fwd = jax.jit(partial(gauge_down_layer_forward, kernel_type=kernel_type,
                          r=r, c_in=c_in, c_out=c_out))
    out = fwd(x, params)
    jax.block_until_ready(out)

    assert out.shape == (B, c_out, 1, 5, H // 2, W // 2), out.shape
    assert bool(jnp.all(jnp.isfinite(out)))
    print("KERNEL_OK")
</pallas_src>

<mosaic_0001>
module attributes {stable_mosaic.version = 11 : i64} {
  func.func @_fused_conv_bn_relu_kernel(%arg0: i32, %arg1: memref<8x40xf32, #tpu.memory_space<vmem>>, %arg2: memref<40x1280xf32, #tpu.memory_space<vmem>>, %arg3: memref<8x1xf32, #tpu.memory_space<vmem>>, %arg4: memref<1x1280xf32, #tpu.memory_space<vmem>>, %arg5: memref<1x1280xf32, #tpu.memory_space<vmem>>, %arg6: memref<8x1xf32, #tpu.memory_space<vmem>>, %arg7: memref<8x1xf32, #tpu.memory_space<vmem>>, %arg8: memref<8x1280xf32, #tpu.memory_space<vmem>>) attributes {dimension_semantics = [#tpu.dimension_semantics<arbitrary>], iteration_bounds = array<i64: 1>, scalar_prefetch = 0 : i64, scratch_operands = 0 : i64, tpu.core_type = #tpu.core_type<tc>, window_params = [{pipeline_mode = #tpu.pipeline_mode<synchronous>, transform_indices = @transform_0, window_bounds = array<i64: 8, 40>}, {pipeline_mode = #tpu.pipeline_mode<synchronous>, transform_indices = @transform_1, window_bounds = array<i64: 40, 1280>}, {pipeline_mode = #tpu.pipeline_mode<synchronous>, transform_indices = @transform_2, window_bounds = array<i64: 8, 1>}, {pipeline_mode = #tpu.pipeline_mode<synchronous>, transform_indices = @transform_3, window_bounds = array<i64: 1, 1280>}, {pipeline_mode = #tpu.pipeline_mode<synchronous>, transform_indices = @transform_4, window_bounds = array<i64: 1, 1280>}, {pipeline_mode = #tpu.pipeline_mode<synchronous>, transform_indices = @transform_5, window_bounds = array<i64: 8, 1>}, {pipeline_mode = #tpu.pipeline_mode<synchronous>, transform_indices = @transform_6, window_bounds = array<i64: 8, 1>}, {pipeline_mode = #tpu.pipeline_mode<synchronous>, transform_indices = @transform_7, window_bounds = array<i64: 8, 1280>}]} {
    %c0 = arith.constant 0 : index
    %c0_0 = arith.constant 0 : index
    %0 = vector.load %arg1[%c0, %c0_0] : memref<8x40xf32, #tpu.memory_space<vmem>>, vector<8x40xf32>
    %c0_1 = arith.constant 0 : index
    %c0_2 = arith.constant 0 : index
    %1 = vector.load %arg2[%c0_1, %c0_2] : memref<40x1280xf32, #tpu.memory_space<vmem>>, vector<40x1280xf32>
    %cst = arith.constant dense<0.000000e+00> : vector<8x1280xf32>
    %2 = tpu.matmul %0, %1, %cst {dimension_numbers = #tpu.dot_dimension_numbers<[1], [0], [0], [1], [0, 0, 1, 1], [], []>} : vector<8x40xf32>, vector<40x1280xf32>, vector<8x1280xf32> -> vector<8x1280xf32>
    %c0_3 = arith.constant 0 : index
    %c0_4 = arith.constant 0 : index
    %3 = vector.load %arg3[%c0_3, %c0_4] : memref<8x1xf32, #tpu.memory_space<vmem>>, vector<8x1xf32>
    %4 = vector.broadcast %3 : vector<8x1xf32> to vector<8x1280xf32>
    %5 = arith.addf %2, %4 : vector<8x1280xf32>
    %c0_5 = arith.constant 0 : index
    %c0_6 = arith.constant 0 : index
    %6 = vector.load %arg4[%c0_5, %c0_6] : memref<1x1280xf32, #tpu.memory_space<vmem>>, vector<1x1280xf32>
    %7 = vector.broadcast %6 : vector<1x1280xf32> to vector<8x1280xf32>
    %8 = arith.mulf %5, %7 : vector<8x1280xf32>
    %cst_7 = arith.constant dense<0.000000e+00> : vector<8xf32>
    %9 = vector.multi_reduction <add>, %8, %cst_7 [1] : vector<8x1280xf32> to vector<8xf32>
    %10 = vector.shape_cast %9 : vector<8xf32> to vector<8x1xf32>
    %cst_8 = arith.constant 7.812500e-04 : f32
    %11 = vector.broadcast %cst_8 : f32 to vector<8x1xf32>
    %12 = arith.mulf %10, %11 : vector<8x1xf32>
    %13 = vector.broadcast %12 : vector<8x1xf32> to vector<8x1280xf32>
    %14 = arith.subf %8, %13 : vector<8x1280xf32>
    %c0_9 = arith.constant 0 : index
    %c0_10 = arith.constant 0 : index
    %15 = vector.load %arg5[%c0_9, %c0_10] : memref<1x1280xf32, #tpu.memory_space<vmem>>, vector<1x1280xf32>
    %16 = vector.broadcast %15 : vector<1x1280xf32> to vector<8x1280xf32>
    %17 = arith.mulf %14, %16 : vector<8x1280xf32>
    %18 = arith.mulf %17, %17 : vector<8x1280xf32>
    %cst_11 = arith.constant dense<0.000000e+00> : vector<8xf32>
    %19 = vector.multi_reduction <add>, %18, %cst_11 [1] : vector<8x1280xf32> to vector<8xf32>
    %20 = vector.shape_cast %19 : vector<8xf32> to vector<8x1xf32>
    %cst_12 = arith.constant 7.812500e-04 : f32
    %21 = vector.broadcast %cst_12 : f32 to vector<8x1xf32>
    %22 = arith.mulf %20, %21 : vector<8x1xf32>
    %cst_13 = arith.constant 9.99999974E-6 : f32
    %23 = vector.broadcast %cst_13 : f32 to vector<8x1xf32>
    %24 = arith.addf %22, %23 : vector<8x1xf32>
    %25 = math.rsqrt %24 : vector<8x1xf32>
    %26 = vector.broadcast %25 : vector<8x1xf32> to vector<8x1280xf32>
    %27 = arith.mulf %17, %26 : vector<8x1280xf32>
    %c0_14 = arith.constant 0 : index
    %c0_15 = arith.constant 0 : index
    %28 = vector.load %arg6[%c0_14, %c0_15] : memref<8x1xf32, #tpu.memory_space<vmem>>, vector<8x1xf32>
    %29 = vector.broadcast %28 : vector<8x1xf32> to vector<8x1280xf32>
    %30 = arith.mulf %27, %29 : vector<8x1280xf32>
    %c0_16 = arith.constant 0 : index
    %c0_17 = arith.constant 0 : index
    %31 = vector.load %arg7[%c0_16, %c0_17] : memref<8x1xf32, #tpu.memory_space<vmem>>, vector<8x1xf32>
    %32 = vector.broadcast %31 : vector<8x1xf32> to vector<8x1280xf32>
    %33 = arith.addf %30, %32 : vector<8x1280xf32>
    %cst_18 = arith.constant 0.000000e+00 : f32
    %34 = vector.broadcast %cst_18 : f32 to vector<8x1280xf32>
    %35 = arith.maximumf %33, %34 : vector<8x1280xf32>
    %c0_19 = arith.constant 0 : index
    %c0_20 = arith.constant 0 : index
    %36 = vector.load %arg8[%c0_19, %c0_20] : memref<8x1280xf32, #tpu.memory_space<vmem>>, vector<8x1280xf32>
    tpu.vector_store %arg8[%c0_19, %c0_20], %35 {strides = array<i32>} : memref<8x1280xf32, #tpu.memory_space<vmem>>, vector<8x1280xf32>,
    return
  }
  func.func @transform_0(%arg0: i32) -> (i32, i32) {
    %c0_i32 = arith.constant 0 : i32
    %c0_i32_0 = arith.constant 0 : i32
    %c0_i32_1 = arith.constant 0 : i32
    return %c0_i32, %c0_i32_0 : i32, i32
  }
  func.func @transform_1(%arg0: i32) -> (i32, i32) {
    %c0_i32 = arith.constant 0 : i32
    %c0_i32_0 = arith.constant 0 : i32
    %c0_i32_1 = arith.constant 0 : i32
    return %c0_i32, %c0_i32_0 : i32, i32
  }
  func.func @transform_2(%arg0: i32) -> (i32, i32) {
    %c0_i32 = arith.constant 0 : i32
    %c0_i32_0 = arith.constant 0 : i32
    %c0_i32_1 = arith.constant 0 : i32
    return %c0_i32, %c0_i32_0 : i32, i32
  }
  func.func @transform_3(%arg0: i32) -> (i32, i32) {
    %c0_i32 = arith.constant 0 : i32
    %c0_i32_0 = arith.constant 0 : i32
    %c0_i32_1 = arith.constant 0 : i32
    return %c0_i32, %c0_i32_0 : i32, i32
  }
  func.func @transform_4(%arg0: i32) -> (i32, i32) {
    %c0_i32 = arith.constant 0 : i32
    %c0_i32_0 = arith.constant 0 : i32
    %c0_i32_1 = arith.constant 0 : i32
    return %c0_i32, %c0_i32_0 : i32, i32
  }
  func.func @transform_5(%arg0: i32) -> (i32, i32) {
    %c0_i32 = arith.constant 0 : i32
    %c0_i32_0 = arith.constant 0 : i32
    %c0_i32_1 = arith.constant 0 : i32
    return %c0_i32, %c0_i32_0 : i32, i32
  }
  func.func @transform_6(%arg0: i32) -> (i32, i32) {
    %c0_i32 = arith.constant 0 : i32
    %c0_i32_0 = arith.constant 0 : i32
    %c0_i32_1 = arith.constant 0 : i32
    return %c0_i32, %c0_i32_0 : i32, i32
  }
  func.func @transform_7(%arg0: i32) -> (i32, i32) {
    %c0_i32 = arith.constant 0 : i32
    %c0_i32_0 = arith.constant 0 : i32
    %c0_i32_1 = arith.constant 0 : i32
    return %c0_i32, %c0_i32_0 : i32, i32
  }
}

</mosaic_0001>

<llo_original>
// kernel: gauge_down_layer_forward.1
$region0: #{gauge_down_layer_forward.1}
  #allocation0 [shape = 'u32[]', space=smem, size = 0x4, offset = 0x4, fixed_abs, tag = 'smem constant byte address 0x4 - core index']
  #allocation1 [shape = 'u32[144,128]{1,0:T(1,128)}', space=vmem, size = 0x12000, scoped, tag = 'internal scratch']
  %s0 = inlined_call_operand.vmem [shape: f32[8,40], index: 0, kind: input, shape index: {}]
  %s1 = inlined_call_operand.vmem [shape: f32[40,1280], index: 1, kind: input, shape index: {}]
  %s2 = inlined_call_operand.vmem [shape: f32[8,1], index: 2, kind: input, shape index: {}]
  %s3 = inlined_call_operand.vmem [shape: f32[1,1280], index: 3, kind: input, shape index: {}]
  %s4 = inlined_call_operand.vmem [shape: f32[1,1280], index: 4, kind: input, shape index: {}]
  %s5 = inlined_call_operand.vmem [shape: f32[8,1], index: 5, kind: input, shape index: {}]
  %s6 = inlined_call_operand.vmem [shape: f32[8,1], index: 6, kind: input, shape index: {}]
  %s7 = inlined_call_operand.vmem [shape: f32[8,1280], index: 7, kind: output, shape index: {}]
  %s8 = sld [smem:[#allocation0]]
  $region38: #{gauge_down_layer_forward.1} parent=0
    _
  %s10 = ssub.s32 1, %s8
  %s11 = scalar_select 0, %s10, %s8
  // Predicated region
  $region2: #{gauge_down_layer_forward.1} parent=0 // pred_check
    _
  $region3: #{gauge_down_layer_forward.1} parent=0 // pred_check_branch
    %13 = sbr.rel (0) target = $region5
  $region4: #{gauge_down_layer_forward.1} parent=0 // pred_region
    _
  $region5: #{gauge_down_layer_forward.1} parent=0 // pred_fallthru
    _
  // Predicated region
  $region6: #{gauge_down_layer_forward.1} parent=0 // pred_check
    _
  $region7: #{gauge_down_layer_forward.1} parent=0 // pred_check_branch
    %15 = sbr.rel (0) target = $region9
  $region8: #{gauge_down_layer_forward.1} parent=0 // pred_region
    _
  $region9: #{gauge_down_layer_forward.1} parent=0 // pred_fallthru
    _
  // Predicated region
  $region10: #{gauge_down_layer_forward.1} parent=0 // pred_check
    _
  $region11: #{gauge_down_layer_forward.1} parent=0 // pred_check_branch
    %17 = sbr.rel (0) target = $region13
  $region12: #{gauge_down_layer_forward.1} parent=0 // pred_region
    _
  $region13: #{gauge_down_layer_forward.1} parent=0 // pred_fallthru
    _
  // Predicated region
  $region14: #{gauge_down_layer_forward.1} parent=0 // pred_check
    _
  $region15: #{gauge_down_layer_forward.1} parent=0 // pred_check_branch
    %19 = sbr.rel (0) target = $region17
  $region16: #{gauge_down_layer_forward.1} parent=0 // pred_region
    _
  $region17: #{gauge_down_layer_forward.1} parent=0 // pred_fallthru
    _
  // Predicated region
  $region18: #{gauge_down_layer_forward.1} parent=0 // pred_check
    _
  $region19: #{gauge_down_layer_forward.1} parent=0 // pred_check_branch
    %21 = sbr.rel (0) target = $region21
  $region20: #{gauge_down_layer_forward.1} parent=0 // pred_region
    _
  $region21: #{gauge_down_layer_forward.1} parent=0 // pred_fallthru
    _
  // Predicated region
  $region22: #{gauge_down_layer_forward.1} parent=0 // pred_check
    _
  $region23: #{gauge_down_layer_forward.1} parent=0 // pred_check_branch
    %23 = sbr.rel (0) target = $region25
  $region24: #{gauge_down_layer_forward.1} parent=0 // pred_region
    _
  $region25: #{gauge_down_layer_forward.1} parent=0 // pred_fallthru
    _
  // Predicated region
  $region26: #{gauge_down_layer_forward.1} parent=0 // pred_check
    _
  $region27: #{gauge_down_layer_forward.1} parent=0 // pred_check_branch
    %25 = sbr.rel (0) target = $region29
  $region28: #{gauge_down_layer_forward.1} parent=0 // pred_region
    _
  $region29: #{gauge_down_layer_forward.1} parent=0 // pred_fallthru
    _
  %v26 = vld [vmem:[%s0] sm:$0xff]
  %v27 = vld [vmem:[%s1] sm:$0xff]
  %v28 = vld [vmem:[%s1 + $0x8] sm:$0xff]
  %v29 = vld [vmem:[%s1 + $0x10] sm:$0xff]
  %v30 = vld [vmem:[%s1 + $0x18] sm:$0xff]
  %v31 = vld [vmem:[%s1 + $0x20] sm:$0xff]
  %v32 = vld [vmem:[%s1 + $0x28] sm:$0xff]
  %v33 = vld [vmem:[%s1 + $0x30] sm:$0xff]
  %v34 = vld [vmem:[%s1 + $0x38] sm:$0xff]
  %v35 = vld [vmem:[%s1 + $0x40] sm:$0xff]
  %v36 = vld [vmem:[%s1 + $0x48] sm:$0xff]
  %v37 = vld [vmem:[%s1 + $0x50] sm:$0xff]
  %v38 = vld [vmem:[%s1 + $0x58] sm:$0xff]
  %v39 = vld [vmem:[%s1 + $0x60] sm:$0xff]
  %v40 = vld [vmem:[%s1 + $0x68] sm:$0xff]
  %v41 = vld [vmem:[%s1 + $0x70] sm:$0xff]
  %v42 = vld [vmem:[%s1 + $0x78] sm:$0xff]
  %v43 = vld [vmem:[%s1 + $0x80] sm:$0xff]
  %v44 = vld [vmem:[%s1 + $0x88] sm:$0xff]
  %v45 = vld [vmem:[%s1 + $0x90] sm:$0xff]
  %v46 = vld [vmem:[%s1 + $0x98] sm:$0xff]
  %v47 = vld [vmem:[%s1 + $0xa0] sm:$0xff]
  %v48 = vld [vmem:[%s1 + $0xa8] sm:$0xff]
  %v49 = vld [vmem:[%s1 + $0xb0] sm:$0xff]
  %v50 = vld [vmem:[%s1 + $0xb8] sm:$0xff]
  %v51 = vld [vmem:[%s1 + $0xc0] sm:$0xff]
  %v52 = vld [vmem:[%s1 + $0xc8] sm:$0xff]
  %v53 = vld [vmem:[%s1 + $0xd0] sm:$0xff]
  %v54 = vld [vmem:[%s1 + $0xd8] sm:$0xff]
  %v55 = vld [vmem:[%s1 + $0xe0] sm:$0xff]
  %v56 = vld [vmem:[%s1 + $0xe8] sm:$0xff]
  %v57 = vld [vmem:[%s1 + $0xf0] sm:$0xff]
  %v58 = vld [vmem:[%s1 + $0xf8] sm:$0xff]
  %v59 = vld [vmem:[%s1 + $0x100] sm:$0xff]
  %v60 = vld [vmem:[%s1 + $0x108] sm:$0xff]
  %v61 = vld [vmem:[%s1 + $0x110] sm:$0xff]
  %v62 = vld [vmem:[%s1 + $0x118] sm:$0xff]
  %v63 = vld [vmem:[%s1 + $0x120] sm:$0xff]
  %v64 = vld [vmem:[%s1 + $0x128] sm:$0xff]
  %v65 = vld [vmem:[%s1 + $0x130] sm:$0xff]
  %v66 = vld [vmem:[%s1 + $0x138] sm:$0xff]
  %v67 = vld [vmem:[%s1 + $0x140] sm:$0xff]
  %v68 = vld [vmem:[%s1 + $0x148] sm:$0xff]
  %v69 = vld [vmem:[%s1 + $0x150] sm:$0xff]
  %v70 = vld [vmem:[%s1 + $0x158] sm:$0xff]
  %v71 = vld [vmem:[%s1 + $0x160] sm:$0xff]
  %v72 = vld [vmem:[%s1 + $0x168] sm:$0xff]
  %v73 = vld [vmem:[%s1 + $0x170] sm:$0xff]
  %v74 = vld [vmem:[%s1 + $0x178] sm:$0xff]
  %v75 = vld [vmem:[%s1 + $0x180] sm:$0xff]
  %v76 = vld [vmem:[%s1 + $0x188] sm:$0xff]
  %v77 = vld [vmem:[%s2] sm:$0xff]
  %79 = vset.pattern.permute.xlu0 0
  %80 = vperm.xlu0 %79, %v77
  %v81 = vpop.permute.xlu0 %80
  %vm83 = vcmask 326656
  %v85 = vsel %vm83, %v26, 0
  %87 = vmatprep.subr.mxu0 %v28
  %88 = vmatpush1.msra.mxu0 %v27
  %89 = vmatprep.subr.mxu0 %v38
  %90 = vmatpush1.msra.mxu0 %v37
  %91 = vmatprep.subr.mxu0 %v48
  %92 = vmatpush1.msra.mxu0 %v47
  %93 = vmatprep.subr.mxu0 %v58
  %94 = vmatpush1.msra.mxu0 %v57
  %95 = vmatprep.subr.mxu0 %v68
  %96 = vmatpush1.msra.mxu0 %v67
  %97 = vmatprep.subr.mxu0 0.0
  %98 = vmatpush1.msra.mxu0 0.0
  %99 = vmatprep.subr.mxu0 0.0
  %100 = vmatpush1.msra.mxu0 0.0
  %101 = vmatprep.subr.mxu0 0.0
  %102 = vmatpush1.msra.mxu0 0.0
  %103 = vmatprep.subr.mxu0 0.0
  %104 = vmatpush1.msra.mxu0 0.0
  %105 = vmatprep.subr.mxu0 0.0
  %106 = vmatpush1.msra.mxu0 0.0
  %107 = vmatprep.subr.mxu0 0.0
  %108 = vmatpush1.msra.mxu0 0.0
  %109 = vmatprep.subr.mxu0 0.0
  %110 = vmatpush1.msra.mxu0 0.0
  %111 = vmatprep.subr.mxu0 0.0
  %112 = vmatpush1.msra.mxu0 0.0
  %113 = vmatprep.subr.mxu0 0.0
  %114 = vmatpush1.msra.mxu0 0.0
  %115 = vmatprep.subr.mxu0 0.0
  %116 = vmatpush1.msra.mxu0 0.0
  %117 = vmatprep.subr.mxu0 0.0
  %118 = vmatpush1.msra.mxu0 0.0
  %119 = vmatprep.subr.mxu0 0.0
  %120 = vmatpush1.msra.mxu0 0.0
  %121 = vmatprep.subr.mxu0 0.0
  %122 = vmatpush1.msra.mxu0 0.0
  %123 = vmatprep.subr.mxu0 0.0
  %124 = vmatpush1.msra.mxu0 0.0
  %125 = vmatprep.subr.mxu0 0.0
  %126 = vmatpush1.msra.mxu0 0.0
  %127 = vmatprep.subr.mxu0 0.0
  %128 = vmatpush1.msra.mxu0 0.0
  %129 = vmatprep.subr.mxu0 0.0
  %130 = vmatpush1.msra.mxu0 0.0
  %131 = vmatprep.subr.mxu0 0.0
  %132 = vmatpush1.msra.mxu0 0.0
  %133 = vmatprep.subr.mxu0 0.0
  %134 = vmatpush1.msra.mxu0 0.0
  %135 = vmatprep.subr.mxu0 0.0
  %136 = vmatpush1.msra.mxu0 0.0
  %137 = vmatprep.subr.mxu0 0.0
  %138 = vmatpush1.msra.mxu0 0.0
  %139 = vmatprep.subr.mxu0 0.0
  %140 = vmatpush1.msra.mxu0 0.0
  %141 = vmatprep.subr.mxu0 0.0
  %142 = vmatpush1.msra.mxu0 0.0
  %143 = vmatprep.subr.mxu0 0.0
  %144 = vmatpush1.msra.mxu0 0.0
  %145 = vmatprep.subr.mxu0 0.0
  %146 = vmatpush1.msra.mxu0 0.0
  %147 = vmatprep.subr.mxu0 0.0
  %148 = vmatpush1.msra.mxu0 0.0
  %149 = vmatprep.subr.mxu0 0.0
  %150 = vmatpush1.msra.mxu0 0.0
  %151 = vmatprep.mubr.f32.mxu0 0.0
  %152 = vmatmul.mubr.f32.gmra.mrb[0].mxu0 %v85
  %v153 = vpop.f32.mrb[0].mxu0
  %v154 = vadd.f32 %v81, %v153
  %v155 = vpop.f32.mrb[0].mxu0
  %v156 = vadd.f32 %v81, %v155
  %157 = vdwg.mxu0
  %158 = vmatprep.subr.mxu0 %v30
  %159 = vmatpush1.msra.mxu0 %v29
  %160 = vmatprep.subr.mxu0 %v40
  %161 = vmatpush1.msra.mxu0 %v39
  %162 = vmatprep.subr.mxu0 %v50
  %163 = vmatpush1.msra.mxu0 %v49
  %164 = vmatprep.subr.mxu0 %v60
  %165 = vmatpush1.msra.mxu0 %v59
  %166 = vmatprep.subr.mxu0 %v70
  %167 = vmatpush1.msra.mxu0 %v69
  %168 = vmatprep.subr.mxu0 0.0
  %169 = vmatpush1.msra.mxu0 0.0
  %170 = vmatprep.subr.mxu0 0.0
  %171 = vmatpush1.msra.mxu0 0.0
  %172 = vmatprep.subr.mxu0 0.0
  %173 = vmatpush1.msra.mxu0 0.0
  %174 = vmatprep.subr.mxu0 0.0
  %175 = vmatpush1.msra.mxu0 0.0
  %176 = vmatprep.subr.mxu0 0.0
  %177 = vmatpush1.msra.mxu0 0.0
  %178 = vmatprep.subr.mxu0 0.0
  %179 = vmatpush1.msra.mxu0 0.0
  %180 = vmatprep.subr.mxu0 0.0
  %181 = vmatpush1.msra.mxu0 0.0
  %182 = vmatprep.subr.mxu0 0.0
  %183 = vmatpush1.msra.mxu0 0.0
  %184 = vmatprep.subr.mxu0 0.0
  %185 = vmatpush1.msra.mxu0 0.0
  %186 = vmatprep.subr.mxu0 0.0
  %187 = vmatpush1.msra.mxu0 0.0
  %188 = vmatprep.subr.mxu0 0.0
  %189 = vmatpush1.msra.mxu0 0.0
  %190 = vmatprep.subr.mxu0 0.0
  %191 = vmatpush1.msra.mxu0 0.0
  %192 = vmatprep.subr.mxu0 0.0
  %193 = vmatpush1.msra.mxu0 0.0
  %194 = vmatprep.subr.mxu0 0.0
  %195 = vmatpush1.msra.mxu0 0.0
  %196 = vmatprep.subr.mxu0 0.0
  %197 = vmatpush1.msra.mxu0 0.0
  %198 = vmatprep.subr.mxu0 0.0
  %199 = vmatpush1.msra.mxu0 0.0
  %200 = vmatprep.subr.mxu0 0.0
  %201 = vmatpush1.msra.mxu0 0.0
  %202 = vmatprep.subr.mxu0 0.0
  %203 = vmatpush1.msra.mxu0 0.0
  %204 = vmatprep.subr.mxu0 0.0
  %205 = vmatpush1.msra.mxu0 0.0
  %206 = vmatprep.subr.mxu0 0.0
  %207 = vmatpush1.msra.mxu0 0.0
  %208 = vmatprep.subr.mxu0 0.0
  %209 = vmatpush1.msra.mxu0 0.0
  %210 = vmatprep.subr.mxu0 0.0
  %211 = vmatpush1.msra.mxu0 0.0
  %212 = vmatprep.subr.mxu0 0.0
  %213 = vmatpush1.msra.mxu0 0.0
  %214 = vmatprep.subr.mxu0 0.0
  %215 = vmatpush1.msra.mxu0 0.0
  %216 = vmatprep.subr.mxu0 0.0
  %217 = vmatpush1.msra.mxu0 0.0
  %218 = vmatprep.subr.mxu0 0.0
  %219 = vmatpush1.msra.mxu0 0.0
  %220 = vmatprep.subr.mxu0 0.0
  %221 = vmatpush1.msra.mxu0 0.0
  %222 = vmatprep.mubr.f32.mxu0 0.0
  %223 = vmatmul.mubr.f32.gmra.mrb[0].mxu0 %v85
  %v224 = vpop.f32.mrb[0].mxu0
  %v225 = vadd.f32 %v81, %v224
  %v226 = vpop.f32.mrb[0].mxu0
  %v227 = vadd.f32 %v81, %v226
  %228 = vdwg.mxu0
  %229 = vmatprep.subr.mxu0 %v32
  %230 = vmatpush1.msra.mxu0 %v31
  %231 = vmatprep.subr.mxu0 %v42
  %232 = vmatpush1.msra.mxu0 %v41
  %233 = vmatprep.subr.mxu0 %v52
  %234 = vmatpush1.msra.mxu0 %v51
  %235 = vmatprep.subr.mxu0 %v62
  %236 = vmatpush1.msra.mxu0 %v61
  %237 = vmatprep.subr.mxu0 %v72
  %238 = vmatpush1.msra.mxu0 %v71
  %239 = vmatprep.subr.mxu0 0.0
  %240 = vmatpush1.msra.mxu0 0.0
  %241 = vmatprep.subr.mxu0 0.0
  %242 = vmatpush1.msra.mxu0 0.0
  %243 = vmatprep.subr.mxu0 0.0
  %244 = vmatpush1.msra.mxu0 0.0
  %245 = vmatprep.subr.mxu0 0.0
  %246 = vmatpush1.msra.mxu0 0.0
  %247 = vmatprep.subr.mxu0 0.0
  %248 = vmatpush1.msra.mxu0 0.0
  %249 = vmatprep.subr.mxu0 0.0
  %250 = vmatpush1.msra.mxu0 0.0
  %251 = vmatprep.subr.mxu0 0.0
  %252 = vmatpush1.msra.mxu0 0.0
  %253 = vmatprep.subr.mxu0 0.0
  %254 = vmatpush1.msra.mxu0 0.0
  %255 = vmatprep.subr.mxu0 0.0
  %256 = vmatpush1.msra.mxu0 0.0
  %257 = vmatprep.subr.mxu0 0.0
  %258 = vmatpush1.msra.mxu0 0.0
  %259 = vmatprep.subr.mxu0 0.0
  %260 = vmatpush1.msra.mxu0 0.0
  %261 = vmatprep.subr.mxu0 0.0
  %262 = vmatpush1.msra.mxu0 0.0
  %263 = vmatprep.subr.mxu0 0.0
  %264 = vmatpush1.msra.mxu0 0.0
  %265 = vmatprep.subr.mxu0 0.0
  %266 = vmatpush1.msra.mxu0 0.0
  %267 = vmatprep.subr.mxu0 0.0
  %268 = vmatpush1.msra.mxu0 0.0
  %269 = vmatprep.subr.mxu0 0.0
  %270 = vmatpush1.msra.mxu0 0.0
  %271 = vmatprep.subr.mxu0 0.0
  %272 = vmatpush1.msra.mxu0 0.0
  %273 = vmatprep.subr.mxu0 0.0
  %274 = vmatpush1.msra.mxu0 0.0
  %275 = vmatprep.subr.mxu0 0.0
  %276 = vmatpush1.msra.mxu0 0.0
  %277 = vmatprep.subr.mxu0 0.0
  %278 = vmatpush1.msra.mxu0 0.0
  %279 = vmatprep.subr.mxu0 0.0
  %280 = vmatpush1.msra.mxu0 0.0
  %281 = vmatprep.subr.mxu0 0.0
  %282 = vmatpush1.msra.mxu0 0.0
  %283 = vmatprep.subr.mxu0 0.0
  %284 = vmatpush1.msra.mxu0 0.0
  %285 = vmatprep.subr.mxu0 0.0
  %286 = vmatpush1.msra.mxu0 0.0
  %287 = vmatprep.subr.mxu0 0.0
  %288 = vmatpush1.msra.mxu0 0.0
  %289 = vmatprep.subr.mxu0 0.0
  %290 = vmatpush1.msra.mxu0 0.0
  %291 = vmatprep.subr.mxu0 0.0
  %292 = vmatpush1.msra.mxu0 0.0
  %293 = vmatprep.mubr.f32.mxu0 0.0
  %294 = vmatmul.mubr.f32.gmra.mrb[0].mxu0 %v85
  %v295 = vpop.f32.mrb[0].mxu0
  %v296 = vadd.f32 %v81, %v295
  %v297 = vpop.f32.mrb[0].mxu0
  %v298 = vadd.f32 %v81, %v297
  %299 = vdwg.mxu0
  %300 = vmatprep.subr.mxu0 %v34
  %301 = vmatpush1.msra.mxu0 %v33
  %302 = vmatprep.subr.mxu0 %v44
  %303 = vmatpush1.msra.mxu0 %v43
  %304 = vmatprep.subr.mxu0 %v54
  %305 = vmatpush1.msra.mxu0 %v53
  %306 = vmatprep.subr.mxu0 %v64
  %307 = vmatpush1.msra.mxu0 %v63
  %308 = vmatprep.subr.mxu0 %v74
  %309 = vmatpush1.msra.mxu0 %v73
  %310 = vmatprep.subr.mxu0 0.0
  %311 = vmatpush1.msra.mxu0 0.0
  %312 = vmatprep.subr.mxu0 0.0
  %313 = vmatpush1.msra.mxu0 0.0
  %314 = vmatprep.subr.mxu0 0.0
  %315 = vmatpush1.msra.mxu0 0.0
  %316 = vmatprep.subr.mxu0 0.0
  %317 = vmatpush1.msra.mxu0 0.0
  %318 = vmatprep.subr.mxu0 0.0
  %319 = vmatpush1.msra.mxu0 0.0
  %320 = vmatprep.subr.mxu0 0.0
  %321 = vmatpush1.msra.mxu0 0.0
  %322 = vmatprep.subr.mxu0 0.0
  %323 = vmatpush1.msra.mxu0 0.0
  %324 = vmatprep.subr.mxu0 0.0
  %325 = vmatpush1.msra.mxu0 0.0
  %326 = vmatprep.subr.mxu0 0.0
  %327 = vmatpush1.msra.mxu0 0.0
  %328 = vmatprep.subr.mxu0 0.0
  %329 = vmatpush1.msra.mxu0 0.0
  %330 = vmatprep.subr.mxu0 0.0
  %331 = vmatpush1.msra.mxu0 0.0
  %332 = vmatprep.subr.mxu0 0.0
  %333 = vmatpush1.msra.mxu0 0.0
  %334 = vmatprep.subr.mxu0 0.0
  %335 = vmatpush1.msra.mxu0 0.0
  %336 = vmatprep.subr.mxu0 0.0
  %337 = vmatpush1.msra.mxu0 0.0
  %338 = vmatprep.subr.mxu0 0.0
  %339 = vmatpush1.msra.mxu0 0.0
  %340 = vmatprep.subr.mxu0 0.0
  %341 = vmatpush1.msra.mxu0 0.0
  %342 = vmatprep.subr.mxu0 0.0
  %343 = vmatpush1.msra.mxu0 0.0
  %344 = vmatprep.subr.mxu0 0.0
  %345 = vmatpush1.msra.mxu0 0.0
  %346 = vmatprep.subr.mxu0 0.0
  %347 = vmatpush1.msra.mxu0 0.0
  %348 = vmatprep.subr.mxu0 0.0
  %349 = vmatpush1.msra.mxu0 0.0
  %350 = vmatprep.subr.mxu0 0.0
  %351 = vmatpush1.msra.mxu0 0.0
  %352 = vmatprep.subr.mxu0 0.0
  %353 = vmatpush1.msra.mxu0 0.0
  %354 = vmatprep.subr.mxu0 0.0
  %355 = vmatpush1.msra.mxu0 0.0
  %356 = vmatprep.subr.mxu0 0.0
  %357 = vmatpush1.msra.mxu0 0.0
  %358 = vmatprep.subr.mxu0 0.0
  %359 = vmatpush1.msra.mxu0 0.0
  %360 = vmatprep.subr.mxu0 0.0
  %361 = vmatpush1.msra.mxu0 0.0
  %362 = vmatprep.subr.mxu0 0.0
  %363 = vmatpush1.msra.mxu0 0.0
  %364 = vmatprep.mubr.f32.mxu0 0.0
  %365 = vmatmul.mubr.f32.gmra.mrb[0].mxu0 %v85
  %v366 = vpop.f32.mrb[0].mxu0
  %v367 = vadd.f32 %v81, %v366
  %v368 = vpop.f32.mrb[0].mxu0
  %v369 = vadd.f32 %v81, %v368
  %370 = vdwg.mxu0
  %371 = vmatprep.subr.mxu0 %v36
  %372 = vmatpush1.msra.mxu0 %v35
  %373 = vmatprep.subr.mxu0 %v46
  %374 = vmatpush1.msra.mxu0 %v45
  %375 = vmatprep.subr.mxu0 %v56
  %376 = vmatpush1.msra.mxu0 %v55
  %377 = vmatprep.subr.mxu0 %v66
  %378 = vmatpush1.msra.mxu0 %v65
  %379 = vmatprep.subr.mxu0 %v76
  %380 = vmatpush1.msra.mxu0 %v75
  %381 = vmatprep.subr.mxu0 0.0
  %382 = vmatpush1.msra.mxu0 0.0
  %383 = vmatprep.subr.mxu0 0.0
  %384 = vmatpush1.msra.mxu0 0.0
  %385 = vmatprep.subr.mxu0 0.0
  %386 = vmatpush1.msra.mxu0 0.0
  %387 = vmatprep.subr.mxu0 0.0
  %388 = vmatpush1.msra.mxu0 0.0
  %389 = vmatprep.subr.mxu0 0.0
  %390 = vmatpush1.msra.mxu0 0.0
  %391 = vmatprep.subr.mxu0 0.0
  %392 = vmatpush1.msra.mxu0 0.0
  %393 = vmatprep.subr.mxu0 0.0
  %394 = vmatpush1.msra.mxu0 0.0
  %395 = vmatprep.subr.mxu0 0.0
  %396 = vmatpush1.msra.mxu0 0.0
  %397 = vmatprep.subr.mxu0 0.0
  %398 = vmatpush1.msra.mxu0 0.0
  %399 = vmatprep.subr.mxu0 0.0
  %400 = vmatpush1.msra.mxu0 0.0
  %401 = vmatprep.subr.mxu0 0.0
  %402 = vmatpush1.msra.mxu0 0.0
  %403 = vmatprep.subr.mxu0 0.0
  %404 = vmatpush1.msra.mxu0 0.0
  %405 = vmatprep.subr.mxu0 0.0
  %406 = vmatpush1.msra.mxu0 0.0
  %407 = vmatprep.subr.mxu0 0.0
  %408 = vmatpush1.msra.mxu0 0.0
  %409 = vmatprep.subr.mxu0 0.0
  %410 = vmatpush1.msra.mxu0 0.0
  %411 = vmatprep.subr.mxu0 0.0
  %412 = vmatpush1.msra.mxu0 0.0
  %413 = vmatprep.subr.mxu0 0.0
  %414 = vmatpush1.msra.mxu0 0.0
  %415 = vmatprep.subr.mxu0 0.0
  %416 = vmatpush1.msra.mxu0 0.0
  %417 = vmatprep.subr.mxu0 0.0
  %418 = vmatpush1.msra.mxu0 0.0
  %419 = vmatprep.subr.mxu0 0.0
  %420 = vmatpush1.msra.mxu0 0.0
  %421 = vmatprep.subr.mxu0 0.0
  %422 = vmatpush1.msra.mxu0 0.0
  %423 = vmatprep.subr.mxu0 0.0
  %424 = vmatpush1.msra.mxu0 0.0
  %425 = vmatprep.subr.mxu0 0.0
  %426 = vmatpush1.msra.mxu0 0.0
  %427 = vmatprep.subr.mxu0 0.0
  %428 = vmatpush1.msra.mxu0 0.0
  %429 = vmatprep.subr.mxu0 0.0
  %430 = vmatpush1.msra.mxu0 0.0
  %431 = vmatprep.subr.mxu0 0.0
  %432 = vmatpush1.msra.mxu0 0.0
  %433 = vmatprep.subr.mxu0 0.0
  %434 = vmatpush1.msra.mxu0 0.0
  %435 = vmatprep.mubr.f32.mxu0 0.0
  %436 = vmatmul.mubr.f32.gmra.mrb[0].mxu0 %v85
  %v437 = vpop.f32.mrb[0].mxu0
  %v438 = vadd.f32 %v81, %v437
  %v439 = vpop.f32.mrb[0].mxu0
  %v440 = vadd.f32 %v81, %v439
  %441 = vdwg.mxu0
  %v442 = vld [vmem:[%s3] sm:$0xff]
  %v443 = vld [vmem:[%s3 + $0x8] sm:$0x3]
  %v446 = vlaneseq
  %v447 = vshrl.u32 %v446, 7
  %v448 = vsub.s32 0, %v447
  %v449 = vrot.slane %v442, %v448
  %v450 = vlaneseq
  %v451 = vshrl.u32 %v450, 7
  %v452 = vsub.s32 1, %v451
  %v453 = vrot.slane %v442, %v452
  %v454 = vlaneseq
  %v455 = vshrl.u32 %v454, 7
  %v456 = vsub.s32 2, %v455
  %v457 = vrot.slane %v442, %v456
  %v458 = vlaneseq
  %v459 = vshrl.u32 %v458, 7
  %v460 = vsub.s32 3, %v459
  %v461 = vrot.slane %v442, %v460
  %v462 = vlaneseq
  %v463 = vshrl.u32 %v462, 7
  %v464 = vsub.s32 4, %v463
  %v465 = vrot.slane %v442, %v464
  %v466 = vlaneseq
  %v467 = vshrl.u32 %v466, 7
  %v468 = vsub.s32 5, %v467
  %v469 = vrot.slane %v442, %v468
  %v470 = vlaneseq
  %v471 = vshrl.u32 %v470, 7
  %v472 = vsub.s32 6, %v471
  %v473 = vrot.slane %v442, %v472
  %v474 = vlaneseq
  %v475 = vshrl.u32 %v474, 7
  %v476 = vsub.s32 7, %v475
  %v477 = vrot.slane %v442, %v476
  %v478 = vlaneseq
  %v479 = vshrl.u32 %v478, 7
  %v480 = vsub.s32 0, %v479
  %v481 = vrot.slane %v443, %v480
  %v482 = vlaneseq
  %v483 = vshrl.u32 %v482, 7
  %v484 = vsub.s32 1, %v483
  %v485 = vrot.slane %v443, %v484
  %v496 = vmul.f32 %v154, %v449
  %v497 = vmul.f32 %v156, %v453
  %v498 = vmul.f32 %v225, %v457
  %v499 = vmul.f32 %v227, %v461
  %v500 = vmul.f32 %v296, %v465
  %v501 = vmul.f32 %v298, %v469
  %v502 = vmul.f32 %v367, %v473
  %v503 = vmul.f32 %v369, %v477
  %v504 = vmul.f32 %v438, %v481
  %v505 = vmul.f32 %v440, %v485
  %v506 = vadd.f32 %v496, %v497
  %v507 = vadd.f32 %v506, %v498
  %v508 = vadd.f32 %v507, %v499
  %v509 = vadd.f32 %v508, %v500
  %v510 = vadd.f32 %v509, %v501
  %v511 = vadd.f32 %v510, %v502
  %v512 = vadd.f32 %v511, %v503
  %v513 = vadd.f32 %v512, %v504
  %v514 = vadd.f32 %v513, %v505
  %515 = vadd.xlane.f32.xlu0 %v514
  %v516 = vpop.xlane.xlu0 %515
  %v517 = vmul.f32 %v516, 0.00078125
  %v518 = vsub.f32 %v496, %v517
  %v519 = vsub.f32 %v497, %v517
  %v520 = vsub.f32 %v498, %v517
  %v521 = vsub.f32 %v499, %v517
  %v522 = vsub.f32 %v500, %v517
  %v523 = vsub.f32 %v501, %v517
  %v524 = vsub.f32 %v502, %v517
  %v525 = vsub.f32 %v503, %v517
  %v526 = vsub.f32 %v504, %v517
  %v527 = vsub.f32 %v505, %v517
  %v528 = vld [vmem:[%s4] sm:$0xff]
  %v529 = vld [vmem:[%s4 + $0x8] sm:$0x3]
  %v532 = vlaneseq
  %v533 = vshrl.u32 %v532, 7
  %v534 = vsub.s32 0, %v533
  %v535 = vrot.slane %v528, %v534
  %v536 = vlaneseq
  %v537 = vshrl.u32 %v536, 7
  %v538 = vsub.s32 1, %v537
  %v539 = vrot.slane %v528, %v538
  %v540 = vlaneseq
  %v541 = vshrl.u32 %v540, 7
  %v542 = vsub.s32 2, %v541
  %v543 = vrot.slane %v528, %v542
  %v544 = vlaneseq
  %v545 = vshrl.u32 %v544, 7
  %v546 = vsub.s32 3, %v545
  %v547 = vrot.slane %v528, %v546
  %v548 = vlaneseq
  %v549 = vshrl.u32 %v548, 7
  %v550 = vsub.s32 4, %v549
  %v551 = vrot.slane %v528, %v550
  %v552 = vlaneseq
  %v553 = vshrl.u32 %v552, 7
  %v554 = vsub.s32 5, %v553
  %v555 = vrot.slane %v528, %v554
  %v556 = vlaneseq
  %v557 = vshrl.u32 %v556, 7
  %v558 = vsub.s32 6, %v557
  %v559 = vrot.slane %v528, %v558
  %v560 = vlaneseq
  %v561 = vshrl.u32 %v560, 7
  %v562 = vsub.s32 7, %v561
  %v563 = vrot.slane %v528, %v562
  %v564 = vlaneseq
  %v565 = vshrl.u32 %v564, 7
  %v566 = vsub.s32 0, %v565
  %v567 = vrot.slane %v529, %v566
  %v568 = vlaneseq
  %v569 = vshrl.u32 %v568, 7
  %v570 = vsub.s32 1, %v569
  %v571 = vrot.slane %v529, %v570
  %v582 = vmul.f32 %v518, %v535
  %v583 = vmul.f32 %v519, %v539
  %v584 = vmul.f32 %v520, %v543
  %v585 = vmul.f32 %v521, %v547
  %v586 = vmul.f32 %v522, %v551
  %v587 = vmul.f32 %v523, %v555
  %v588 = vmul.f32 %v524, %v559
  %v589 = vmul.f32 %v525, %v563
  %v590 = vmul.f32 %v526, %v567
  %v591 = vmul.f32 %v527, %v571
  %v592 = vmul.f32 %v582, %v582
  %v593 = vmul.f32 %v583, %v583
  %v594 = vmul.f32 %v584, %v584
  %v595 = vmul.f32 %v585, %v585
  %v596 = vmul.f32 %v586, %v586
  %v597 = vmul.f32 %v587, %v587
  %v598 = vmul.f32 %v588, %v588
  %v599 = vmul.f32 %v589, %v589
  %v600 = vmul.f32 %v590, %v590
  %v601 = vmul.f32 %v591, %v591
  %v602 = vadd.f32 %v592, %v593
  %v603 = vadd.f32 %v602, %v594
  %v604 = vadd.f32 %v603, %v595
  %v605 = vadd.f32 %v604, %v596
  %v606 = vadd.f32 %v605, %v597
  %v607 = vadd.f32 %v606, %v598
  %v608 = vadd.f32 %v607, %v599
  %v609 = vadd.f32 %v608, %v600
  %v610 = vadd.f32 %v609, %v601
  %611 = vadd.xlane.f32.xlu0 %v610
  %v612 = vpop.xlane.xlu0 %611
  %v613 = vmul.f32 %v612, 0.00078125
  %v614 = vadd.f32 %v613, 1e-05
  %v615 = vrsqrt.pop %v614
  %v616 = vmul.f32 %v582, %v615
  %v617 = vmul.f32 %v583, %v615
  %v618 = vmul.f32 %v584, %v615
  %v619 = vmul.f32 %v585, %v615
  %v620 = vmul.f32 %v586, %v615
  %v621 = vmul.f32 %v587, %v615
  %v622 = vmul.f32 %v588, %v615
  %v623 = vmul.f32 %v589, %v615
  %v624 = vmul.f32 %v590, %v615
  %v625 = vmul.f32 %v591, %v615
  %v626 = vld [vmem:[%s5] sm:$0xff]
  %628 = vset.pattern.permute.xlu0 0
  %629 = vperm.xlu0 %628, %v626
  %v630 = vpop.permute.xlu0 %629
  %v632 = vmul.f32 %v616, %v630
  %v633 = vmul.f32 %v617, %v630
  %v634 = vmul.f32 %v618, %v630
  %v635 = vmul.f32 %v619, %v630
  %v636 = vmul.f32 %v620, %v630
  %v637 = vmul.f32 %v621, %v630
  %v638 = vmul.f32 %v622, %v630
  %v639 = vmul.f32 %v623, %v630
  %v640 = vmul.f32 %v624, %v630
  %v641 = vmul.f32 %v625, %v630
  %v642 = vld [vmem:[%s6] sm:$0xff]
  %644 = vset.pattern.permute.xlu0 0
  %645 = vperm.xlu0 %644, %v642
  %v646 = vpop.permute.xlu0 %645
  %v648 = vadd.f32 %v632, %v646
  %v649 = vadd.f32 %v633, %v646
  %v650 = vadd.f32 %v634, %v646
  %v651 = vadd.f32 %v635, %v646
  %v652 = vadd.f32 %v636, %v646
  %v653 = vadd.f32 %v637, %v646
  %v654 = vadd.f32 %v638, %v646
  %v655 = vadd.f32 %v639, %v646
  %v656 = vadd.f32 %v640, %v646
  %v657 = vadd.f32 %v641, %v646
  %v658 = vmax.f32 %v648, 0.0
  %v659 = vmax.f32 %v649, 0.0
  %v660 = vmax.f32 %v650, 0.0
  %v661 = vmax.f32 %v651, 0.0
  %v662 = vmax.f32 %v652, 0.0
  %v663 = vmax.f32 %v653, 0.0
  %v664 = vmax.f32 %v654, 0.0
  %v665 = vmax.f32 %v655, 0.0
  %v666 = vmax.f32 %v656, 0.0
  %v667 = vmax.f32 %v657, 0.0
  %668 = vst [vmem:[%s7] sm:$0xff] %v658
  %669 = vst [vmem:[%s7 + $0x8] sm:$0xff] %v659
  %670 = vst [vmem:[%s7 + $0x10] sm:$0xff] %v660
  %671 = vst [vmem:[%s7 + $0x18] sm:$0xff] %v661
  %672 = vst [vmem:[%s7 + $0x20] sm:$0xff] %v662
  %673 = vst [vmem:[%s7 + $0x28] sm:$0xff] %v663
  %674 = vst [vmem:[%s7 + $0x30] sm:$0xff] %v664
  %675 = vst [vmem:[%s7 + $0x38] sm:$0xff] %v665
  %676 = vst [vmem:[%s7 + $0x40] sm:$0xff] %v666
  %677 = vst [vmem:[%s7 + $0x48] sm:$0xff] %v667
  // Predicated region
  $region30: #{gauge_down_layer_forward.1} parent=0 // pred_check
    _
  $region31: #{gauge_down_layer_forward.1} parent=0 // pred_check_branch
    %679 = sbr.rel (0) target = $region33
  $region32: #{gauge_down_layer_forward.1} parent=0 // pred_region
    _
  $region33: #{gauge_down_layer_forward.1} parent=0 // pred_fallthru
    _
  // Predicated region
  $region34: #{gauge_down_layer_forward.1} parent=0 // pred_check
    _
  $region35: #{gauge_down_layer_forward.1} parent=0 // pred_check_branch
    %681 = sbr.rel (0) target = $region37
  $region36: #{gauge_down_layer_forward.1} parent=0 // pred_region
    _
  $region37: #{gauge_down_layer_forward.1} parent=0 // pred_fallthru
    _

</llo_original>
